<compile_context>
chip_gen: v7x
topology: tpu7x:2x2x1
jax: 0.10.0
libtpu: 0.0.40
codegen_flags: <defaults>
</compile_context>

<pallas_src>
import jax
import jax.numpy as jnp
from jax.experimental import pallas as pl
from jax.experimental.pallas import tpu as pltpu


# ---------------------------------------------------------------------------
# Kernels
# ---------------------------------------------------------------------------

def _h2_kernel(z_ref, w1_ref, b1_ref, w2_ref, b2_ref, h2_ref):
    """fc1 -> ReLU -> fc2 -> ReLU for one batch tile.

    h2 is stored directly in the weight dtype so the fc3 kernel consumes it
    without any per-column-step cast.
    """
    z = z_ref[...].astype(w1_ref.dtype)
    h1 = jnp.dot(z, w1_ref[...], preferred_element_type=jnp.float32)
    h1 = jnp.maximum(h1 + b1_ref[...], 0.0)            # f32 elementwise (v5e-safe)
    h2 = jnp.dot(h1.astype(w2_ref.dtype), w2_ref[...],
                 preferred_element_type=jnp.float32)
    h2 = jnp.maximum(h2 + b2_ref[...], 0.0)
    h2_ref[...] = h2.astype(h2_ref.dtype)


def _fc3_kernel(h2_ref, w3_ref, b3_ref, x_ref):
    """fc3 (symmetry pre-folded) for one (batch tile, column tile)."""
    x = jnp.dot(h2_ref[...], w3_ref[...], preferred_element_type=jnp.float32)
    x_ref[...] = (x + b3_ref[...]).astype(x_ref.dtype)


# ---------------------------------------------------------------------------
# Sizing helpers
# ---------------------------------------------------------------------------

def _round_up(x, m):
    return ((x + m - 1) // m) * m


def _vmem_capacity_bytes():
    """Physical VMEM per TensorCore (64 MiB v7x, 128 MiB v5e/v6e)."""
    try:
        info = pltpu.get_tpu_info()
        cap = getattr(info, "vmem_capacity_bytes", None)
        if cap:
            return int(cap)
    except Exception:
        pass
    return 64 * 1024 * 1024  # conservative default (v7x per-TC)


def _vmem_budgets():
    cap = _vmem_capacity_bytes()
    tile_budget = min((cap * 3) // 4, 96 << 20)   # what the tn sizing may use
    vmem_limit = min((cap * 7) // 8, 112 << 20)   # compiler scoped-VMEM limit
    return tile_budget, vmem_limit


def _choose_tm(b, w_itemsize):
    """Batch tile: fill the MXU M dim when possible; sublane-align when tiny."""
    if b >= 512:
        return 512
    if b >= 256:
        return 256
    if b >= 128:
        return 128
    mult = 8 if w_itemsize >= 4 else 16          # bf16 packs 2 rows / sublane
    return _round_up(max(b, 1), mult)


def _choose_col_tile(cols_padded, tm, w_bytes, budget_bytes):
    """Largest multiple-of-128 divisor of cols_padded fitting the VMEM budget.

    Budget (double-buffered): w3 tile 2*(256*tn*w_bytes), f32 output tile
    2*(tm*tn*4), b3 2*(tn*4); plus fixed h2 input 2*(tm*256*w_bytes) and a
    small misc margin.
    """
    fixed = 2 * tm * 256 * w_bytes + (2 << 20)
    per_col = 2 * 256 * w_bytes + 2 * tm * 4 + 2 * 4
    tn_max = max((budget_bytes - fixed) // per_col, 128)
    tn_max = (tn_max // 128) * 128
    if cols_padded <= tn_max:
        return cols_padded
    t = tn_max
    while t >= 256:
        if cols_padded % t == 0:
            return t
        t -= 128
    return 128  # always divides: cols_padded is a multiple of 128


# ---------------------------------------------------------------------------
# Parameter preparation (do once at init)
# ---------------------------------------------------------------------------

def prepare_params(params, num_nodes, weights_dtype=jnp.bfloat16):
    """Fold (A + A^T)/2 into fc3, pad fc3 columns, cast weights.

    bf16 weights are the default fast path (activations fed to the MXU are
    also bf16; accumulation stays f32).  Pass weights_dtype=jnp.float32 for
    exact parity with the PyTorch reference.
    """
    w1, b1, w2, b2, w3, b3 = params
    n = num_nodes
    h = w3.shape[0]
    nn = n * n

    # Fold the output symmetrization into fc3 (it is linear in fc3's output).
    w3r = w3.reshape(h, n, n)
    w3s = (0.5 * (w3r + jnp.swapaxes(w3r, 1, 2))).reshape(h, nn)
    b3r = b3.reshape(1, n, n)
    b3s = (0.5 * (b3r + jnp.swapaxes(b3r, 1, 2))).reshape(1, nn)

    # Pad columns so tiles are lane-dense and a good divisor always exists.
    align = 128 if nn <= 4096 else 4096
    nn_pad = _round_up(nn, align)
    if nn_pad != nn:
        w3s = jnp.pad(w3s, ((0, 0), (0, nn_pad - nn)))
        b3s = jnp.pad(b3s, ((0, 0), (0, nn_pad - nn)))

    return (w1.astype(weights_dtype), b1.astype(jnp.float32),
            w2.astype(weights_dtype), b2.astype(jnp.float32),
            w3s.astype(weights_dtype), b3s.astype(jnp.float32))


# ---------------------------------------------------------------------------
# Forward wrapper
# ---------------------------------------------------------------------------

def weighted_graph_decoder(z, prepared_params, num_nodes):
    """Pallas implementation of WeightedGraphDecoder.forward."""
    w1, b1, w2, b2, w3, b3 = prepared_params
    B, d_in = z.shape
    hidden1 = w1.shape[1]
    hidden2 = w2.shape[1]
    nn_cols = num_nodes * num_nodes
    nn_cols_pad = w3.shape[1]
    w_dtype = w1.dtype
    w_bytes = jnp.dtype(w_dtype).itemsize

    tile_budget, vmem_limit = _vmem_budgets()
    tm = _choose_tm(B, w_bytes)
    b_pad = _round_up(B, tm)
    if b_pad != B:
        z = jnp.pad(z, ((0, b_pad - B), (0, 0)))

    res = lambda i: (0, 0)  # weights resident across the whole grid

    # ---- Stage 1: h2 = relu(relu(z@W1+b1)@W2+b2), stored in weight dtype ----
    h2 = pl.pallas_call(
        _h2_kernel,
        out_shape=jax.ShapeDtypeStruct((b_pad, hidden2), w_dtype),
        grid_spec=pltpu.PrefetchScalarGridSpec(
            num_scalar_prefetch=0,
            grid=(b_pad // tm,),
            in_specs=[
                pl.BlockSpec((tm, d_in), lambda i: (i, 0)),
                pl.BlockSpec(w1.shape, res),
                pl.BlockSpec(b1.shape, res),
                pl.BlockSpec(w2.shape, res),
                pl.BlockSpec(b2.shape, res),
            ],
            out_specs=pl.BlockSpec((tm, hidden2), lambda i: (i, 0)),
        ),
        compiler_params=pltpu.CompilerParams(
            dimension_semantics=("parallel",),
            vmem_limit_bytes=vmem_limit,
        ),
    )(z, w1, b1, w2, b2)

    # ---- Stage 2: x = h2 @ W3_sym + b3_sym (column-tiled, col axis OUTER) ----
    tn = _choose_col_tile(nn_cols_pad, tm, w_bytes, tile_budget)
    grid = (nn_cols_pad // tn, b_pad // tm)  # (columns outer, batch inner)
    # w3 block index is constant along the inner axis -> DMA'd exactly once.

    x = pl.pallas_call(
        _fc3_kernel,
        out_shape=jax.ShapeDtypeStruct((b_pad, nn_cols_pad), jnp.float32),
        grid_spec=pltpu.PrefetchScalarGridSpec(
            num_scalar_prefetch=0,
            grid=grid,
            in_specs=[
                pl.BlockSpec((tm, hidden2), lambda c, b: (b, 0)),   # h2 (tiny)
                pl.BlockSpec((hidden2, tn), lambda c, b: (0, c)),   # w3 col tile
                pl.BlockSpec((1, tn), lambda c, b: (0, c)),         # b3 col tile
            ],
            out_specs=pl.BlockSpec((tm, tn), lambda c, b: (b, c)),
        ),
        compiler_params=pltpu.CompilerParams(
            dimension_semantics=("parallel", "parallel"),
            vmem_limit_bytes=vmem_limit,
        ),
    )(h2, w3, b3)

    return x[:B, :nn_cols].reshape(B, num_nodes, num_nodes)


# ---------------------------------------------------------------------------
# Synthetic params + plain-JAX reference
# ---------------------------------------------------------------------------

def init_params(key, input_dim, num_nodes):
    """Deterministic synthetic parameters (shapes from the module __init__)."""
    dims = [(input_dim, 128), (128, 256), (256, num_nodes * num_nodes)]
    params = []
    for i, (fan_in, fan_out) in enumerate(dims):
        kw, kb = jax.random.split(jax.random.fold_in(key, i))
        scale = 1.0 / jnp.sqrt(jnp.float32(fan_in))
        w = jax.random.uniform(kw, (fan_in, fan_out), jnp.float32, -scale, scale)
        b = jax.random.uniform(kb, (1, fan_out), jnp.float32, -scale, scale)
        params += [w, b]
    return tuple(params)


def reference_forward(z, params, num_nodes):
    """Plain-JAX reference mirroring the PyTorch forward exactly."""
    w1, b1, w2, b2, w3, b3 = params
    x = jnp.maximum(z @ w1 + b1, 0.0)
    x = jnp.maximum(x @ w2 + b2, 0.0)
    x = x @ w3 + b3
    adj = x.reshape(-1, num_nodes, num_nodes)
    return (adj + jnp.swapaxes(adj, 1, 2)) / 2.0


if __name__ == "__main__":
    B, INPUT_DIM, NUM_NODES = 2, 32, 16

    key = jax.random.PRNGKey(0)
    kz, kp = jax.random.split(key)
    z = jax.random.normal(kz, (B, INPUT_DIM), jnp.float32)
    params = init_params(kp, INPUT_DIM, NUM_NODES)
    ref = reference_forward(z, params, NUM_NODES)

    # Default fast path: bf16 weights, f32 accumulation (looser tolerance).
    prepared = prepare_params(params, NUM_NODES)          # bf16 default
    out = jax.block_until_ready(weighted_graph_decoder(z, prepared, NUM_NODES))
    assert out.shape == (B, NUM_NODES, NUM_NODES), out.shape
    assert jnp.allclose(out, ref, atol=1e-1, rtol=1e-1), "bf16 mismatch vs reference"
    assert jnp.allclose(out, jnp.swapaxes(out, 1, 2), atol=1e-6), "not symmetric"

    # f32 parity path: exact match with the PyTorch-style reference.
    prepared_f32 = prepare_params(params, NUM_NODES, jnp.float32)
    out_f32 = jax.block_until_ready(
        weighted_graph_decoder(z, prepared_f32, NUM_NODES))
    assert jnp.allclose(out_f32, ref, atol=1e-4, rtol=1e-4), "f32 mismatch vs reference"
    assert jnp.allclose(out_f32, jnp.swapaxes(out_f32, 1, 2), atol=1e-6)

    print("KERNEL_OK")
</pallas_src>

<mosaic_0001>
module attributes {stable_mosaic.version = 11 : i64} {
  func.func @_h2_kernel(%arg0: i32, %arg1: memref<16x32xf32, #tpu.memory_space<vmem>>, %arg2: memref<32x128xbf16, #tpu.memory_space<vmem>>, %arg3: memref<1x128xf32, #tpu.memory_space<vmem>>, %arg4: memref<128x256xbf16, #tpu.memory_space<vmem>>, %arg5: memref<1x256xf32, #tpu.memory_space<vmem>>, %arg6: memref<16x256xbf16, #tpu.memory_space<vmem>>) attributes {dimension_semantics = [#tpu.dimension_semantics<parallel>], iteration_bounds = array<i64: 1>, scalar_prefetch = 0 : i64, scratch_operands = 0 : i64, tpu.core_type = #tpu.core_type<tc>, window_params = [{transform_indices = @transform_0, window_bounds = array<i64: 16, 32>}, {pipeline_mode = #tpu.pipeline_mode<synchronous>, transform_indices = @transform_1, window_bounds = array<i64: 32, 128>}, {pipeline_mode = #tpu.pipeline_mode<synchronous>, transform_indices = @transform_2, window_bounds = array<i64: 1, 128>}, {pipeline_mode = #tpu.pipeline_mode<synchronous>, transform_indices = @transform_3, window_bounds = array<i64: 128, 256>}, {pipeline_mode = #tpu.pipeline_mode<synchronous>, transform_indices = @transform_4, window_bounds = array<i64: 1, 256>}, {transform_indices = @transform_5, window_bounds = array<i64: 16, 256>}]} {
    %c0 = arith.constant 0 : index
    %c0_0 = arith.constant 0 : index
    %0 = vector.load %arg1[%c0, %c0_0] : memref<16x32xf32, #tpu.memory_space<vmem>>, vector<16x32xf32>
    %1 = arith.truncf %0 : vector<16x32xf32> to vector<16x32xbf16>
    %c0_1 = arith.constant 0 : index
    %c0_2 = arith.constant 0 : index
    %2 = vector.load %arg2[%c0_1, %c0_2] : memref<32x128xbf16, #tpu.memory_space<vmem>>, vector<32x128xbf16>
    %cst = arith.constant dense<0.000000e+00> : vector<16x128xf32>
    %3 = tpu.matmul %1, %2, %cst {dimension_numbers = #tpu.dot_dimension_numbers<[1], [0], [0], [1], [0, 0, 1, 1], [], []>} : vector<16x32xbf16>, vector<32x128xbf16>, vector<16x128xf32> -> vector<16x128xf32>
    %c0_3 = arith.constant 0 : index
    %c0_4 = arith.constant 0 : index
    %4 = vector.load %arg3[%c0_3, %c0_4] : memref<1x128xf32, #tpu.memory_space<vmem>>, vector<1x128xf32>
    %5 = vector.broadcast %4 : vector<1x128xf32> to vector<16x128xf32>
    %6 = arith.addf %3, %5 : vector<16x128xf32>
    %cst_5 = arith.constant 0.000000e+00 : f32
    %7 = vector.broadcast %cst_5 : f32 to vector<16x128xf32>
    %8 = arith.maximumf %6, %7 : vector<16x128xf32>
    %9 = arith.truncf %8 : vector<16x128xf32> to vector<16x128xbf16>
    %c0_6 = arith.constant 0 : index
    %c0_7 = arith.constant 0 : index
    %10 = vector.load %arg4[%c0_6, %c0_7] : memref<128x256xbf16, #tpu.memory_space<vmem>>, vector<128x256xbf16>
    %cst_8 = arith.constant dense<0.000000e+00> : vector<16x256xf32>
    %11 = tpu.matmul %9, %10, %cst_8 {dimension_numbers = #tpu.dot_dimension_numbers<[1], [0], [0], [1], [0, 0, 1, 1], [], []>} : vector<16x128xbf16>, vector<128x256xbf16>, vector<16x256xf32> -> vector<16x256xf32>
    %c0_9 = arith.constant 0 : index
    %c0_10 = arith.constant 0 : index
    %12 = vector.load %arg5[%c0_9, %c0_10] : memref<1x256xf32, #tpu.memory_space<vmem>>, vector<1x256xf32>
    %13 = vector.broadcast %12 : vector<1x256xf32> to vector<16x256xf32>
    %14 = arith.addf %11, %13 : vector<16x256xf32>
    %cst_11 = arith.constant 0.000000e+00 : f32
    %15 = vector.broadcast %cst_11 : f32 to vector<16x256xf32>
    %16 = arith.maximumf %14, %15 : vector<16x256xf32>
    %17 = arith.truncf %16 : vector<16x256xf32> to vector<16x256xbf16>
    %c0_12 = arith.constant 0 : index
    %c0_13 = arith.constant 0 : index
    %18 = vector.load %arg6[%c0_12, %c0_13] : memref<16x256xbf16, #tpu.memory_space<vmem>>, vector<16x256xbf16>
    tpu.vector_store %arg6[%c0_12, %c0_13], %17 {strides = array<i32>} : memref<16x256xbf16, #tpu.memory_space<vmem>>, vector<16x256xbf16>,
    return
  }
  func.func @transform_0(%arg0: i32) -> (i32, i32) {
    %c0_i32 = arith.constant 0 : i32
    %c0_i32_0 = arith.constant 0 : i32
    return %arg0, %c0_i32 : i32, i32
  }
  func.func @transform_1(%arg0: i32) -> (i32, i32) {
    %c0_i32 = arith.constant 0 : i32
    %c0_i32_0 = arith.constant 0 : i32
    %c0_i32_1 = arith.constant 0 : i32
    return %c0_i32, %c0_i32_0 : i32, i32
  }
  func.func @transform_2(%arg0: i32) -> (i32, i32) {
    %c0_i32 = arith.constant 0 : i32
    %c0_i32_0 = arith.constant 0 : i32
    %c0_i32_1 = arith.constant 0 : i32
    return %c0_i32, %c0_i32_0 : i32, i32
  }
  func.func @transform_3(%arg0: i32) -> (i32, i32) {
    %c0_i32 = arith.constant 0 : i32
    %c0_i32_0 = arith.constant 0 : i32
    %c0_i32_1 = arith.constant 0 : i32
    return %c0_i32, %c0_i32_0 : i32, i32
  }
  func.func @transform_4(%arg0: i32) -> (i32, i32) {
    %c0_i32 = arith.constant 0 : i32
    %c0_i32_0 = arith.constant 0 : i32
    %c0_i32_1 = arith.constant 0 : i32
    return %c0_i32, %c0_i32_0 : i32, i32
  }
  func.func @transform_5(%arg0: i32) -> (i32, i32) {
    %c0_i32 = arith.constant 0 : i32
    %c0_i32_0 = arith.constant 0 : i32
    return %arg0, %c0_i32 : i32, i32
  }
}

</mosaic_0001>

<llo_original>
// kernel: tpu_custom_call.1
$region0: #{tpu_custom_call.1}
  #allocation0 [shape = 'u32[]', space=smem, size = 0x4, offset = 0x4, fixed_abs, tag = 'smem constant byte address 0x4 - core index']
  #allocation1 [shape = 'u32[144,128]{1,0:T(1,128)}', space=vmem, size = 0x12000, scoped, tag = 'internal scratch']
  %s0 = inlined_call_operand.hbm [shape: f32[16,32], index: 0, kind: input, shape index: {}]
  %s1 = inlined_call_operand.hbm [shape: bf16[32,128], index: 1, kind: input, shape index: {}]
  %s2 = inlined_call_operand.vmem [shape: f32[1,128], index: 2, kind: input, shape index: {}]
  %s3 = inlined_call_operand.hbm [shape: bf16[128,256], index: 3, kind: input, shape index: {}]
  %s4 = inlined_call_operand.vmem [shape: f32[1,256], index: 4, kind: input, shape index: {}]
  %s5 = inlined_call_operand.hbm [shape: bf16[16,256], index: 5, kind: output, shape index: {}]
  %s6 = sld [smem:[#allocation0]]
  $region42: #{tpu_custom_call.1} parent=0
    _
  %s8 = ssub.s32 1, %s6
  %s9 = scalar_select 0, %s8, %s6
  $region1: #{tpu_custom_call.1} parent=0
    #allocation2 [shape = 'u8[8192]{0}', space=vmem, size = 0x2000, scoped, tag = 'input window, operand 0, single buffered']
    #allocation3 [shape = 's32[1]{0}', space=sflag, size = 0x4, scoped, tag = 'scoped memory for tpu_custom_call.1']
    #allocation4 [shape = 's32[1]{0}', space=sflag, size = 0x4, scoped, tag = 'scoped memory for tpu_custom_call.1']
    #allocation5 [shape = 'u8[8192]{0}', space=vmem, size = 0x2000, scoped, tag = 'input window, operand 1, single buffered']
    #allocation6 [shape = 's32[1]{0}', space=sflag, size = 0x4, scoped, tag = 'scoped memory for tpu_custom_call.1']
    #allocation7 [shape = 'u8[65536]{0}', space=vmem, size = 0x10000, scoped, tag = 'input window, operand 3, single buffered']
    #allocation8 [shape = 'u8[8192]{0}', space=vmem, size = 0x2000, scoped, tag = 'output window, operand 0, single buffered']
    %10 = vsyncpa [#allocation3], 0
    %11 = vsyncpa [#allocation6], 0
    %12 = vsyncpa [#allocation4], 0
    // Predicated region
    $region2: #{tpu_custom_call.1} parent=1 // pred_check
      _
    $region3: #{tpu_custom_call.1} parent=1 // pred_check_branch
      %14 = sbr.rel (0) target = $region5
    $region4: #{tpu_custom_call.1} parent=1 // pred_region
      %s16 = ssub.s32 256, 256
      %17 = vsyncadd [#allocation3], %s16
      %s18 = sshll.u32 [#allocation2], 4
      %s19 = int_to_ptr.vmem [resolvable:$true] %s18
      %24 = dma.hbm_to_vmem [thread:$0]  %s0, 256, %s19, [#allocation3], 128, 128, 8
    $region5: #{tpu_custom_call.1} parent=1 // pred_fallthru
      _
    // Predicated region
    $region6: #{tpu_custom_call.1} parent=1 // pred_check
      _
    $region7: #{tpu_custom_call.1} parent=1 // pred_check_branch
      %26 = sbr.rel (0) target = $region9
    $region8: #{tpu_custom_call.1} parent=1 // pred_region
      %s28 = ssub.s32 256, 256
      %29 = vsyncadd [#allocation6], %s28
      %s30 = sshll.u32 [#allocation5], 4
      %s31 = int_to_ptr.vmem [resolvable:$true] %s30
      %36 = dma.hbm_to_vmem [thread:$0]  %s1, 256, %s31, [#allocation6], 64, 64, 4
    $region9: #{tpu_custom_call.1} parent=1 // pred_fallthru
      _
    // Predicated region
    $region10: #{tpu_custom_call.1} parent=1 // pred_check
      _
    $region11: #{tpu_custom_call.1} parent=1 // pred_check_branch
      %38 = sbr.rel (0) target = $region13
    $region12: #{tpu_custom_call.1} parent=1 // pred_region
      _
    $region13: #{tpu_custom_call.1} parent=1 // pred_fallthru
      _
    // Predicated region
    $region14: #{tpu_custom_call.1} parent=1 // pred_check
      _
    $region15: #{tpu_custom_call.1} parent=1 // pred_check_branch
      %40 = sbr.rel (0) target = $region17
    $region16: #{tpu_custom_call.1} parent=1 // pred_region
      %s42 = ssub.s32 2048, 2048
      %43 = vsyncadd [#allocation6], %s42
      %s44 = sshll.u32 [#allocation7], 4
      %s45 = int_to_ptr.vmem [resolvable:$true] %s44
      %50 = dma.hbm_to_vmem [thread:$0]  %s3, 2048, %s45, [#allocation6], 128, 128, 8
    $region17: #{tpu_custom_call.1} parent=1 // pred_fallthru
      _
    // Predicated region
    $region18: #{tpu_custom_call.1} parent=1 // pred_check
      _
    $region19: #{tpu_custom_call.1} parent=1 // pred_check_branch
      %52 = sbr.rel (0) target = $region21
    $region20: #{tpu_custom_call.1} parent=1 // pred_region
      _
    $region21: #{tpu_custom_call.1} parent=1 // pred_fallthru
      _
    // Predicated region
    $region22: #{tpu_custom_call.1} parent=1 // pred_check
      _
    $region23: #{tpu_custom_call.1} parent=1 // pred_check_branch
      %54 = sbr.rel (0) target = $region25
    $region24: #{tpu_custom_call.1} parent=1 // pred_region
      %55 = dma.done [#allocation3], 256
    $region25: #{tpu_custom_call.1} parent=1 // pred_fallthru
      _
    // Predicated region
    $region26: #{tpu_custom_call.1} parent=1 // pred_check
      _
    $region27: #{tpu_custom_call.1} parent=1 // pred_check_branch
      %57 = sbr.rel (0) target = $region29
    $region28: #{tpu_custom_call.1} parent=1 // pred_region
      %58 = dma.done [#allocation6], 256
    $region29: #{tpu_custom_call.1} parent=1 // pred_fallthru
      _
    // Predicated region
    $region30: #{tpu_custom_call.1} parent=1 // pred_check
      _
    $region31: #{tpu_custom_call.1} parent=1 // pred_check_branch
      %60 = sbr.rel (0) target = $region33
    $region32: #{tpu_custom_call.1} parent=1 // pred_region
      %61 = dma.done [#allocation6], 2048
    $region33: #{tpu_custom_call.1} parent=1 // pred_fallthru
      _
    %v63 = vld [vmem:[#allocation2] sm:$0xff]
    %v64 = vld [vmem:[#allocation2 + $0x8] sm:$0xff]
    %v65 = vpack.c.bf16 %v64, %v63
    %v66 = vld [vmem:[#allocation5] sm:$0xf]
    %v67 = vld [vmem:[#allocation5 + $0x4] sm:$0xf]
    %v68 = vld [vmem:[#allocation5 + $0x8] sm:$0xf]
    %v69 = vld [vmem:[#allocation5 + $0xc] sm:$0xf]
    %v70 = vld [vmem:[%s2] sm:$0x1]
    %v72 = vlaneseq
    %v73 = vshrl.u32 %v72, 7
    %v74 = vsub.s32 0, %v73
    %v75 = vrot.slane %v70, %v74
    %v81 = vunpack.c.l.b16 %v66
    %v82 = vunpack.c.l.b16 %v67
    %v83 = vunpack.c.l.b16 %v68
    %v84 = vunpack.c.l.b16 %v69
    %v85 = vpack.c.b16 %v82, %v81
    %v86 = vpack.c.b16 %v84, %v83
    %vm89 = vcmask 261120
    %v91 = vsel %vm89, %v65, 0
    %93 = vmatprep.subr.bf16.mxu0 0
    %94 = vmatpush1.bf16.msra.mxu0 %v85
    %95 = vmatprep.subr.bf16.mxu0 0
    %96 = vmatpush1.bf16.msra.mxu0 %v86
    %97 = vmatprep.subr.bf16.mxu0 0
    %98 = vmatpush1.bf16.msra.mxu0 0
    %99 = vmatprep.subr.bf16.mxu0 0
    %100 = vmatpush1.bf16.msra.mxu0 0
    %101 = vmatprep.subr.bf16.mxu0 0
    %102 = vmatpush1.bf16.msra.mxu0 0
    %103 = vmatprep.subr.bf16.mxu0 0
    %104 = vmatpush1.bf16.msra.mxu0 0
    %105 = vmatprep.subr.bf16.mxu0 0
    %106 = vmatpush1.bf16.msra.mxu0 0
    %107 = vmatprep.subr.bf16.mxu0 0
    %108 = vmatpush1.bf16.msra.mxu0 0
    %109 = vmatprep.subr.bf16.mxu0 0
    %110 = vmatpush1.bf16.msra.mxu0 0
    %111 = vmatprep.subr.bf16.mxu0 0
    %112 = vmatpush1.bf16.msra.mxu0 0
    %113 = vmatprep.subr.bf16.mxu0 0
    %114 = vmatpush1.bf16.msra.mxu0 0
    %115 = vmatprep.subr.bf16.mxu0 0
    %116 = vmatpush1.bf16.msra.mxu0 0
    %117 = vmatprep.subr.bf16.mxu0 0
    %118 = vmatpush1.bf16.msra.mxu0 0
    %119 = vmatprep.subr.bf16.mxu0 0
    %120 = vmatpush1.bf16.msra.mxu0 0
    %121 = vmatprep.subr.bf16.mxu0 0
    %122 = vmatpush1.bf16.msra.mxu0 0
    %123 = vmatprep.subr.bf16.mxu0 0
    %124 = vmatpush1.bf16.msra.mxu0 0
    %125 = vmatprep.mubr.bf16.mxu0 0
    %126 = vmatmul.mubr.bf16.gmra.mrb[0].mxu0 %v91
    %v127 = vpop.f32.mrb[0].mxu0
    %v128 = vadd.f32 %v75, %v127
    %v129 = vpop.f32.mrb[0].mxu0
    %v130 = vpop.f32.mrb[0].mxu0
    %v131 = vadd.f32 %v75, %v130
    %v132 = vpop.f32.mrb[0].mxu0
    %133 = vdwg.mxu0
    %v134 = vmax.f32 %v128, 0.0
    %v135 = vmax.f32 %v131, 0.0
    %v136 = vpack.c.bf16 %v135, %v134
    %v137 = vld [vmem:[#allocation7] sm:$0xff]
    %v138 = vld [vmem:[#allocation7 + $0x8] sm:$0xff]
    %v139 = vld [vmem:[#allocation7 + $0x10] sm:$0xff]
    %v140 = vld [vmem:[#allocation7 + $0x18] sm:$0xff]
    %v141 = vld [vmem:[#allocation7 + $0x20] sm:$0xff]
    %v142 = vld [vmem:[#allocation7 + $0x28] sm:$0xff]
    %v143 = vld [vmem:[#allocation7 + $0x30] sm:$0xff]
    %v144 = vld [vmem:[#allocation7 + $0x38] sm:$0xff]
    %v145 = vld [vmem:[#allocation7 + $0x40] sm:$0xff]
    %v146 = vld [vmem:[#allocation7 + $0x48] sm:$0xff]
    %v147 = vld [vmem:[#allocation7 + $0x50] sm:$0xff]
    %v148 = vld [vmem:[#allocation7 + $0x58] sm:$0xff]
    %v149 = vld [vmem:[#allocation7 + $0x60] sm:$0xff]
    %v150 = vld [vmem:[#allocation7 + $0x68] sm:$0xff]
    %v151 = vld [vmem:[#allocation7 + $0x70] sm:$0xff]
    %v152 = vld [vmem:[#allocation7 + $0x78] sm:$0xff]
    %v153 = vld [vmem:[%s4] sm:$0x3]
    %v155 = vlaneseq
    %v156 = vshrl.u32 %v155, 7
    %v157 = vsub.s32 0, %v156
    %v158 = vrot.slane %v153, %v157
    %v159 = vlaneseq
    %v160 = vshrl.u32 %v159, 7
    %v161 = vsub.s32 1, %v160
    %v162 = vrot.slane %v153, %v161
    %v181 = vunpack.c.l.b16 %v137
    %v182 = vunpack.c.h.b16 %v137
    %v183 = vunpack.c.l.b16 %v138
    %v184 = vunpack.c.h.b16 %v138
    %v185 = vunpack.c.l.b16 %v139
    %v186 = vunpack.c.h.b16 %v139
    %v187 = vunpack.c.l.b16 %v140
    %v188 = vunpack.c.h.b16 %v140
    %v189 = vunpack.c.l.b16 %v141
    %v190 = vunpack.c.h.b16 %v141
    %v191 = vunpack.c.l.b16 %v142
    %v192 = vunpack.c.h.b16 %v142
    %v193 = vunpack.c.l.b16 %v143
    %v194 = vunpack.c.h.b16 %v143
    %v195 = vunpack.c.l.b16 %v144
    %v196 = vunpack.c.h.b16 %v144
    %v197 = vunpack.c.l.b16 %v145
    %v198 = vunpack.c.h.b16 %v145
    %v199 = vunpack.c.l.b16 %v146
    %v200 = vunpack.c.h.b16 %v146
    %v201 = vunpack.c.l.b16 %v147
    %v202 = vunpack.c.h.b16 %v147
    %v203 = vunpack.c.l.b16 %v148
    %v204 = vunpack.c.h.b16 %v148
    %v205 = vunpack.c.l.b16 %v149
    %v206 = vunpack.c.h.b16 %v149
    %v207 = vunpack.c.l.b16 %v150
    %v208 = vunpack.c.h.b16 %v150
    %v209 = vunpack.c.l.b16 %v151
    %v210 = vunpack.c.h.b16 %v151
    %v211 = vunpack.c.l.b16 %v152
    %v212 = vunpack.c.h.b16 %v152
    %v213 = vpack.c.b16 %v183, %v181
    %v214 = vpack.c.b16 %v184, %v182
    %v215 = vpack.c.b16 %v187, %v185
    %v216 = vpack.c.b16 %v188, %v186
    %v217 = vpack.c.b16 %v191, %v189
    %v218 = vpack.c.b16 %v192, %v190
    %v219 = vpack.c.b16 %v195, %v193
    %v220 = vpack.c.b16 %v196, %v194
    %v221 = vpack.c.b16 %v199, %v197
    %v222 = vpack.c.b16 %v200, %v198
    %v223 = vpack.c.b16 %v203, %v201
    %v224 = vpack.c.b16 %v204, %v202
    %v225 = vpack.c.b16 %v207, %v205
    %v226 = vpack.c.b16 %v208, %v206
    %v227 = vpack.c.b16 %v211, %v209
    %v228 = vpack.c.b16 %v212, %v210
    %245 = vmatprep.subr.bf16.mxu0 %v214
    %246 = vmatpush1.bf16.msra.mxu0 %v213
    %247 = vmatprep.subr.bf16.mxu0 %v216
    %248 = vmatpush1.bf16.msra.mxu0 %v215
    %249 = vmatprep.subr.bf16.mxu0 %v218
    %250 = vmatpush1.bf16.msra.mxu0 %v217
    %251 = vmatprep.subr.bf16.mxu0 %v220
    %252 = vmatpush1.bf16.msra.mxu0 %v219
    %253 = vmatprep.subr.bf16.mxu0 %v222
    %254 = vmatpush1.bf16.msra.mxu0 %v221
    %255 = vmatprep.subr.bf16.mxu0 %v224
    %256 = vmatpush1.bf16.msra.mxu0 %v223
    %257 = vmatprep.subr.bf16.mxu0 %v226
    %258 = vmatpush1.bf16.msra.mxu0 %v225
    %259 = vmatprep.subr.bf16.mxu0 %v228
    %260 = vmatpush1.bf16.msra.mxu0 %v227
    %261 = vmatprep.subr.bf16.mxu0 0
    %262 = vmatpush1.bf16.msra.mxu0 0
    %263 = vmatprep.subr.bf16.mxu0 0
    %264 = vmatpush1.bf16.msra.mxu0 0
    %265 = vmatprep.subr.bf16.mxu0 0
    %266 = vmatpush1.bf16.msra.mxu0 0
    %267 = vmatprep.subr.bf16.mxu0 0
    %268 = vmatpush1.bf16.msra.mxu0 0
    %269 = vmatprep.subr.bf16.mxu0 0
    %270 = vmatpush1.bf16.msra.mxu0 0
    %271 = vmatprep.subr.bf16.mxu0 0
    %272 = vmatpush1.bf16.msra.mxu0 0
    %273 = vmatprep.subr.bf16.mxu0 0
    %274 = vmatpush1.bf16.msra.mxu0 0
    %275 = vmatprep.subr.bf16.mxu0 0
    %276 = vmatpush1.bf16.msra.mxu0 0
    %277 = vmatprep.mubr.bf16.mxu0 0
    %278 = vmatmul.mubr.bf16.gmra.mrb[0].mxu0 %v136
    %v279 = vpop.f32.mrb[0].mxu0
    %v280 = vadd.f32 %v158, %v279
    %v281 = vpop.f32.mrb[0].mxu0
    %v282 = vadd.f32 %v162, %v281
    %v283 = vpop.f32.mrb[0].mxu0
    %v284 = vadd.f32 %v158, %v283
    %v285 = vpop.f32.mrb[0].mxu0
    %v286 = vadd.f32 %v162, %v285
    %287 = vdwg.mxu0
    %v288 = vmax.f32 %v280, 0.0
    %v289 = vmax.f32 %v282, 0.0
    %v290 = vmax.f32 %v284, 0.0
    %v291 = vmax.f32 %v286, 0.0
    %v292 = vpack.c.bf16 %v290, %v288
    %v293 = vpack.c.bf16 %v291, %v289
    %v296 = vunpack.c.l.b16 %v292
    %v297 = vunpack.c.l.b16 %v293
    %v298 = vunpack.c.h.b16 %v292
    %v299 = vunpack.c.h.b16 %v293
    %v300 = vpack.c.b16 %v297, %v296
    %v301 = vpack.c.b16 %v299, %v298
    %304 = vst [vmem:[#allocation8] sm:$0xff] %v300
    %305 = vst [vmem:[#allocation8 + $0x8] sm:$0xff] %v301
    // Predicated region
    $region34: #{tpu_custom_call.1} parent=1 // pred_check
      _
    $region35: #{tpu_custom_call.1} parent=1 // pred_check_branch
      %307 = sbr.rel (0) target = $region37
    $region36: #{tpu_custom_call.1} parent=1 // pred_region
      %s309 = ssub.s32 256, 256
      %310 = vsyncadd [#allocation4], %s309
      %s311 = sshll.u32 [#allocation8], 4
      %s312 = int_to_ptr.vmem [resolvable:$true] %s311
      %317 = dma.vmem_to_hbm [thread:$0]  %s312, 256, %s5, [#allocation4], 128, 128, 8
    $region37: #{tpu_custom_call.1} parent=1 // pred_fallthru
      _
    // Predicated region
    $region38: #{tpu_custom_call.1} parent=1 // pred_check
      _
    $region39: #{tpu_custom_call.1} parent=1 // pred_check_branch
      %319 = sbr.rel (0) target = $region41
    $region40: #{tpu_custom_call.1} parent=1 // pred_region
      %320 = dma.done [#allocation4], 256
    $region41: #{tpu_custom_call.1} parent=1 // pred_fallthru
      _
    %321 = vsyncpa [#allocation3], 1
    %322 = vsyncpa [#allocation6], 1
    %323 = vsyncpa [#allocation4], 1

</llo_original>
